<compile_context>
chip_gen: v7x
topology: tpu7x:2x2x1
jax: 0.10.0
libtpu: 0.0.40
codegen_flags: <defaults>
</compile_context>

<pallas_src>
import functools

import jax
import jax.numpy as jnp
from jax.experimental import pallas as pl
from jax.experimental.pallas import tpu as pltpu

LANES = 128
MAX_BLOCK_ROWS = 2048  # 2048 x 128 x 4B = 1 MiB per input block


def _loss_kernel(pred_ref, label_ref, out_ref, acc_ref, *,
                 block_rows, n_valid, needs_mask):
    i = pl.program_id(0)

    @pl.when(i == 0)
    def _():
        acc_ref[...] = jnp.zeros_like(acc_ref)

    p = jnp.maximum(pred_ref[...], 1.0)
    p = p * p
    l = jnp.maximum(label_ref[...], 1.0)
    l = l * l
    r = l / p
    term = r + 1.0 / r          # == l/p + p/l

    if needs_mask:
        # Mask out lane padding and any out-of-bounds rows of a ragged last
        # block (their contents are unspecified).
        row = (jax.lax.broadcasted_iota(jnp.int32, term.shape, 0)
               + i * block_rows)
        lane = jax.lax.broadcasted_iota(jnp.int32, term.shape, 1)
        full_rows = n_valid // LANES
        rem = n_valid % LANES
        valid = row < full_rows
        if rem:
            valid = valid | ((row == full_rows) & (lane < rem))
        term = jnp.where(valid, term, 0.0)

    acc_ref[...] += term

    @pl.when(i == pl.num_programs(0) - 1)
    def _():
        out_ref[0, 0] = jnp.sum(acc_ref[...]) / jnp.float32(n_valid)


def custom_loss(y_pred, y_label):
    assert y_pred.shape == y_label.shape
    p_flat = y_pred.astype(jnp.float32).reshape(-1)
    l_flat = y_label.astype(jnp.float32).reshape(-1)

    n_valid = int(p_flat.size)
    rows = -(-n_valid // LANES)
    lane_pad = rows * LANES - n_valid
    if lane_pad:
        # < 128 elements of padding; masked inside the kernel.
        p_flat = jnp.pad(p_flat, (0, lane_pad), constant_values=1.0)
        l_flat = jnp.pad(l_flat, (0, lane_pad), constant_values=1.0)
    p2d = p_flat.reshape(rows, LANES)
    l2d = l_flat.reshape(rows, LANES)

    if rows <= MAX_BLOCK_ROWS:
        block_rows = rows            # block == full dim -> always a legal tile
    else:
        block_rows = MAX_BLOCK_ROWS  # multiple of 8
    num_blocks = -(-rows // block_rows)
    covered = num_blocks * block_rows * LANES
    needs_mask = covered != n_valid

    kernel = functools.partial(
        _loss_kernel,
        block_rows=block_rows,
        n_valid=n_valid,
        needs_mask=needs_mask,
    )

    out = pl.pallas_call(
        kernel,
        out_shape=jax.ShapeDtypeStruct((1, 1), jnp.float32),
        grid_spec=pltpu.PrefetchScalarGridSpec(
            num_scalar_prefetch=0,
            grid=(num_blocks,),
            in_specs=[
                pl.BlockSpec((block_rows, LANES), lambda i: (i, 0)),
                pl.BlockSpec((block_rows, LANES), lambda i: (i, 0)),
            ],
            out_specs=pl.BlockSpec(
                (1, 1), lambda i: (0, 0), memory_space=pltpu.SMEM
            ),
            scratch_shapes=[pltpu.VMEM((block_rows, LANES), jnp.float32)],
        ),
        compiler_params=pltpu.CompilerParams(
            dimension_semantics=("arbitrary",),
        ),
    )(p2d, l2d)

    return out[0, 0]


def _reference(y_pred, y_label):
    p = jnp.maximum(y_pred, 1.0) ** 2
    l = jnp.maximum(y_label, 1.0) ** 2
    return jnp.mean(l / p + p / l)


if __name__ == "__main__":
    key = jax.random.PRNGKey(0)
    k1, k2 = jax.random.split(key)

    # primary test: NCHW-shaped prediction tensor
    y_pred = jax.random.normal(k1, (2, 4, 16, 16), dtype=jnp.float32) * 2.0
    y_label = jax.random.normal(k2, (2, 4, 16, 16), dtype=jnp.float32) * 2.0
    loss = custom_loss(y_pred, y_label)
    jax.block_until_ready(loss)
    ref = _reference(y_pred, y_label)
    assert jnp.allclose(loss, ref, rtol=1e-5, atol=1e-5), (loss, ref)

    # secondary test: ragged element count -> exercises in-kernel tail masking
    k3, k4 = jax.random.split(k1)
    y_pred2 = jax.random.normal(k3, (3, 5, 7, 11), dtype=jnp.float32) * 2.0
    y_label2 = jax.random.normal(k4, (3, 5, 7, 11), dtype=jnp.float32) * 2.0
    loss2 = custom_loss(y_pred2, y_label2)
    jax.block_until_ready(loss2)
    ref2 = _reference(y_pred2, y_label2)
    assert jnp.allclose(loss2, ref2, rtol=1e-5, atol=1e-5), (loss2, ref2)

    print("KERNEL_OK")
</pallas_src>

<mosaic_0001>
module attributes {stable_mosaic.version = 11 : i64} {
  func.func @_loss_kernel(%arg0: i32, %arg1: memref<16x128xf32, #tpu.memory_space<vmem>>, %arg2: memref<16x128xf32, #tpu.memory_space<vmem>>, %arg3: memref<1x1xf32, #tpu.memory_space<smem>>, %arg4: memref<16x128xf32, #tpu.memory_space<vmem>>) attributes {dimension_semantics = [#tpu.dimension_semantics<arbitrary>], iteration_bounds = array<i64: 1>, scalar_prefetch = 0 : i64, scratch_operands = 1 : i64, tpu.core_type = #tpu.core_type<tc>, window_params = [{transform_indices = @transform_0, window_bounds = array<i64: 16, 128>}, {transform_indices = @transform_1, window_bounds = array<i64: 16, 128>}, {transform_indices = @transform_2, window_bounds = array<i64: 1, 1>}]} {
    %c0_i32 = arith.constant 0 : i32
    %0 = arith.cmpi eq, %arg0, %c0_i32 : i32
    %1 = arith.extui %0 : i1 to i32
    %c0_i32_0 = arith.constant 0 : i32
    %2 = arith.cmpi ne, %1, %c0_i32_0 : i32
    scf.if %2 {
      %cst_12 = arith.constant 0.000000e+00 : f32
      %21 = vector.broadcast %cst_12 : f32 to vector<16x128xf32>
      %c0_13 = arith.constant 0 : index
      %c0_14 = arith.constant 0 : index
      %22 = vector.load %arg4[%c0_13, %c0_14] : memref<16x128xf32, #tpu.memory_space<vmem>>, vector<16x128xf32>
      tpu.vector_store %arg4[%c0_13, %c0_14], %21 {strides = array<i32>} : memref<16x128xf32, #tpu.memory_space<vmem>>, vector<16x128xf32>,
    } else {
    }
    %c0 = arith.constant 0 : index
    %c0_1 = arith.constant 0 : index
    %3 = vector.load %arg1[%c0, %c0_1] : memref<16x128xf32, #tpu.memory_space<vmem>>, vector<16x128xf32>
    %cst = arith.constant 1.000000e+00 : f32
    %4 = vector.broadcast %cst : f32 to vector<16x128xf32>
    %5 = arith.maximumf %3, %4 : vector<16x128xf32>
    %6 = arith.mulf %5, %5 : vector<16x128xf32>
    %c0_2 = arith.constant 0 : index
    %c0_3 = arith.constant 0 : index
    %7 = vector.load %arg2[%c0_2, %c0_3] : memref<16x128xf32, #tpu.memory_space<vmem>>, vector<16x128xf32>
    %cst_4 = arith.constant 1.000000e+00 : f32
    %8 = vector.broadcast %cst_4 : f32 to vector<16x128xf32>
    %9 = arith.maximumf %7, %8 : vector<16x128xf32>
    %10 = arith.mulf %9, %9 : vector<16x128xf32>
    %11 = arith.divf %10, %6 : vector<16x128xf32>
    %cst_5 = arith.constant 1.000000e+00 : f32
    %12 = vector.broadcast %cst_5 : f32 to vector<16x128xf32>
    %13 = arith.divf %12, %11 : vector<16x128xf32>
    %14 = arith.addf %11, %13 : vector<16x128xf32>
    %c0_6 = arith.constant 0 : index
    %c0_7 = arith.constant 0 : index
    %15 = vector.load %arg4[%c0_6, %c0_7] : memref<16x128xf32, #tpu.memory_space<vmem>>, vector<16x128xf32>
    %16 = arith.addf %15, %14 : vector<16x128xf32>
    %c0_8 = arith.constant 0 : index
    %c0_9 = arith.constant 0 : index
    %17 = vector.load %arg4[%c0_8, %c0_9] : memref<16x128xf32, #tpu.memory_space<vmem>>, vector<16x128xf32>
    tpu.vector_store %arg4[%c0_8, %c0_9], %16 {strides = array<i32>} : memref<16x128xf32, #tpu.memory_space<vmem>>, vector<16x128xf32>,
    %c0_i32_10 = arith.constant 0 : i32
    %18 = arith.cmpi eq, %arg0, %c0_i32_10 : i32
    %19 = arith.extui %18 : i1 to i32
    %c0_i32_11 = arith.constant 0 : i32
    %20 = arith.cmpi ne, %19, %c0_i32_11 : i32
    scf.if %20 {
      %c0_12 = arith.constant 0 : index
      %c0_13 = arith.constant 0 : index
      %21 = vector.load %arg4[%c0_12, %c0_13] : memref<16x128xf32, #tpu.memory_space<vmem>>, vector<16x128xf32>
      %22 = vector.shape_cast %21 : vector<16x128xf32> to vector<1x16x128xf32>
      %cst_14 = arith.constant dense<0.000000e+00> : vector<1xf32>
      %23 = vector.multi_reduction <add>, %22, %cst_14 [1, 2] : vector<1x16x128xf32> to vector<1xf32>
      %24 = vector.shape_cast %23 : vector<1xf32> to vector<1x1x1xf32>
      %25 = vector.extract %24[0, 0, 0] : f32 from vector<1x1x1xf32>
      %cst_15 = arith.constant 2.048000e+03 : f32
      %26 = arith.divf %25, %cst_15 : f32
      %c0_16 = arith.constant 0 : index
      %c0_17 = arith.constant 0 : index
      %27 = memref.load %arg3[%c0_16, %c0_17] : memref<1x1xf32, #tpu.memory_space<smem>>
      memref.store %26, %arg3[%c0_16, %c0_17] : memref<1x1xf32, #tpu.memory_space<smem>>
    } else {
    }
    return
  }
  func.func @transform_0(%arg0: i32) -> (i32, i32) {
    %c0_i32 = arith.constant 0 : i32
    %c0_i32_0 = arith.constant 0 : i32
    return %arg0, %c0_i32 : i32, i32
  }
  func.func @transform_1(%arg0: i32) -> (i32, i32) {
    %c0_i32 = arith.constant 0 : i32
    %c0_i32_0 = arith.constant 0 : i32
    return %arg0, %c0_i32 : i32, i32
  }
  func.func @transform_2(%arg0: i32) -> (i32, i32) {
    %c0_i32 = arith.constant 0 : i32
    %c0_i32_0 = arith.constant 0 : i32
    %c0_i32_1 = arith.constant 0 : i32
    return %c0_i32, %c0_i32_0 : i32, i32
  }
}

</mosaic_0001>

<llo_original>
// kernel: tpu_custom_call.1
$region0: #{tpu_custom_call.1}
  #allocation0 [shape = 'u32[]', space=smem, size = 0x4, offset = 0x4, fixed_abs, tag = 'smem constant byte address 0x4 - core index']
  #allocation1 [shape = 'u32[144,128]{1,0:T(1,128)}', space=vmem, size = 0x12000, scoped, tag = 'internal scratch']
  #allocation2 [shape = 'f32[16,128]{1,0:T(8,128)}', space=vmem, size = 0x2000, scoped, tag = 'scratch operand']
  %s0 = inlined_call_operand.hbm [shape: f32[16,128], index: 0, kind: input, shape index: {}]
  %s1 = inlined_call_operand.hbm [shape: f32[16,128], index: 1, kind: input, shape index: {}]
  %s2 = inlined_call_operand.hbm [shape: f32[1,1], index: 2, kind: output, shape index: {}]
  %s3 = sld [smem:[#allocation0]]
  $region34: #{tpu_custom_call.1} parent=0
    _
  %s5 = ssub.s32 1, %s3
  %s6 = scalar_select 0, %s5, %s3
  $region1: #{tpu_custom_call.1} parent=0
    #allocation3 [shape = 'u8[8192]{0}', space=vmem, size = 0x2000, scoped, tag = 'input window, operand 0, single buffered']
    #allocation4 [shape = 's32[1]{0}', space=sflag, size = 0x4, scoped, tag = 'scoped memory for tpu_custom_call.1']
    #allocation5 [shape = 's32[1]{0}', space=sflag, size = 0x4, scoped, tag = 'scoped memory for tpu_custom_call.1']
    #allocation6 [shape = 'u8[8192]{0}', space=vmem, size = 0x2000, scoped, tag = 'input window, operand 1, single buffered']
    #allocation7 [shape = 's32[1]{0}', space=sflag, size = 0x4, scoped, tag = 'scoped memory for tpu_custom_call.1']
    #allocation8 [shape = 'u8[512]{0}', space=smem, size = 0x200, scoped, tag = 'output window, operand 0, single buffered']
    %7 = vsyncpa [#allocation4], 0
    %8 = vsyncpa [#allocation7], 0
    %9 = vsyncpa [#allocation5], 0
    // Predicated region
    $region2: #{tpu_custom_call.1} parent=1 // pred_check
      _
    $region3: #{tpu_custom_call.1} parent=1 // pred_check_branch
      %11 = sbr.rel (0) target = $region5
    $region4: #{tpu_custom_call.1} parent=1 // pred_region
      %s13 = ssub.s32 256, 256
      %14 = vsyncadd [#allocation4], %s13
      %s15 = sshll.u32 [#allocation3], 4
      %s16 = int_to_ptr.vmem [resolvable:$true] %s15
      %21 = dma.hbm_to_vmem [thread:$0]  %s0, 256, %s16, [#allocation4], 128, 128, 8
    $region5: #{tpu_custom_call.1} parent=1 // pred_fallthru
      _
    // Predicated region
    $region6: #{tpu_custom_call.1} parent=1 // pred_check
      _
    $region7: #{tpu_custom_call.1} parent=1 // pred_check_branch
      %23 = sbr.rel (0) target = $region9
    $region8: #{tpu_custom_call.1} parent=1 // pred_region
      %s25 = ssub.s32 256, 256
      %26 = vsyncadd [#allocation7], %s25
      %s27 = sshll.u32 [#allocation6], 4
      %s28 = int_to_ptr.vmem [resolvable:$true] %s27
      %33 = dma.hbm_to_vmem [thread:$0]  %s1, 256, %s28, [#allocation7], 128, 128, 8
    $region9: #{tpu_custom_call.1} parent=1 // pred_fallthru
      _
    // Predicated region
    $region10: #{tpu_custom_call.1} parent=1 // pred_check
      _
    $region11: #{tpu_custom_call.1} parent=1 // pred_check_branch
      %35 = sbr.rel (0) target = $region13
    $region12: #{tpu_custom_call.1} parent=1 // pred_region
      %36 = dma.done [#allocation4], 256
    $region13: #{tpu_custom_call.1} parent=1 // pred_fallthru
      _
    // Predicated region
    $region14: #{tpu_custom_call.1} parent=1 // pred_check
      _
    $region15: #{tpu_custom_call.1} parent=1 // pred_check_branch
      %38 = sbr.rel (0) target = $region17
    $region16: #{tpu_custom_call.1} parent=1 // pred_region
      %39 = dma.done [#allocation7], 256
    $region17: #{tpu_custom_call.1} parent=1 // pred_fallthru
      _
    %p40 = scmp.eq.s32.totalorder 0, 0
    // Predicated region
    $region18: #{tpu_custom_call.1} parent=1 // pred_check
      %p41 = pneg %p40
    $region19: #{tpu_custom_call.1} parent=1 // pred_check_branch
      %43 = sbr.rel (%p41) target = $region21
    $region20: #{tpu_custom_call.1} parent=1 // pred_region
      %44 = vst [vmem:[#allocation2] sm:$0xff] 0.0
      %45 = vst [vmem:[#allocation2 + $0x8] sm:$0xff] 0.0
    $region21: #{tpu_custom_call.1} parent=1 // pred_fallthru
      _
    %v46 = vld [vmem:[#allocation3] sm:$0xff]
    %v47 = vld [vmem:[#allocation3 + $0x8] sm:$0xff]
    %v48 = vmax.f32 %v46, 1.0
    %v49 = vmax.f32 %v47, 1.0
    %v50 = vmul.f32 %v48, %v48
    %v51 = vmul.f32 %v49, %v49
    %v52 = vld [vmem:[#allocation6] sm:$0xff]
    %v53 = vld [vmem:[#allocation6 + $0x8] sm:$0xff]
    %v54 = vmax.f32 %v52, 1.0
    %v55 = vmax.f32 %v53, 1.0
    %v56 = vmul.f32 %v54, %v54
    %v57 = vmul.f32 %v55, %v55
    %v58 = vrcp.pop %v50
    %v59 = vmul.f32 %v56, %v58
    %v60 = vrcp.pop %v51
    %v61 = vmul.f32 %v57, %v60
    %v62 = vrcp.pop %v59
    %v63 = vmul.f32 1.0, %v62
    %v64 = vrcp.pop %v61
    %v65 = vmul.f32 1.0, %v64
    %v66 = vadd.f32 %v59, %v63
    %v67 = vadd.f32 %v61, %v65
    %v68 = vld [vmem:[#allocation2] sm:$0xff]
    %v69 = vld [vmem:[#allocation2 + $0x8] sm:$0xff]
    %v70 = vadd.f32 %v68, %v66
    %v71 = vadd.f32 %v69, %v67
    %72 = vst [vmem:[#allocation2] sm:$0xff] %v70
    %73 = vst [vmem:[#allocation2 + $0x8] sm:$0xff] %v71
    // Predicated region
    $region22: #{tpu_custom_call.1} parent=1 // pred_check
      %p74 = pneg %p40
    $region23: #{tpu_custom_call.1} parent=1 // pred_check_branch
      %76 = sbr.rel (%p74) target = $region25
    $region24: #{tpu_custom_call.1} parent=1 // pred_region
      %v77 = vld [vmem:[#allocation2] sm:$0xff]
      %v78 = vld [vmem:[#allocation2 + $0x8] sm:$0xff]
      %v79 = vadd.f32 %v77, %v78
      %80 = vadd.xlane.f32.xlu0 %v79
      %v81 = vpop.xlane.xlu0 %80
      %v82 = vrot.slane %v81, 4
      %v83 = vadd.f32 %v81, %v82
      %v84 = vrot.slane %v83, 2
      %v85 = vadd.f32 %v83, %v84
      %v86 = vrot.slane %v85, 1
      %v87 = vadd.f32 %v85, %v86
      %s88 = vtos %v87
      %v89 = vrcp.pop 2048.0
      %s90 = vtos %v89
      %s91 = smul.f32 %s88, %s90
      %s92 = scalar_lea.smem [#allocation8], 0
      %93 = sst [smem:[%s92]] %s91
    $region25: #{tpu_custom_call.1} parent=1 // pred_fallthru
      _
    // Predicated region
    $region26: #{tpu_custom_call.1} parent=1 // pred_check
      _
    $region27: #{tpu_custom_call.1} parent=1 // pred_check_branch
      %95 = sbr.rel (0) target = $region29
    $region28: #{tpu_custom_call.1} parent=1 // pred_region
      %s97 = ssub.s32 16, 16
      %98 = vsyncadd [#allocation5], %s97
      %101 = dma.smem_to_hbm [#allocation8], 16, %s2, [#allocation5]
    $region29: #{tpu_custom_call.1} parent=1 // pred_fallthru
      _
    // Predicated region
    $region30: #{tpu_custom_call.1} parent=1 // pred_check
      _
    $region31: #{tpu_custom_call.1} parent=1 // pred_check_branch
      %103 = sbr.rel (0) target = $region33
    $region32: #{tpu_custom_call.1} parent=1 // pred_region
      %104 = dma.done [#allocation5], 16
    $region33: #{tpu_custom_call.1} parent=1 // pred_fallthru
      _
    %105 = sfence
    %106 = vsyncpa [#allocation4], 1
    %107 = vsyncpa [#allocation7], 1
    %108 = vsyncpa [#allocation5], 1

</llo_original>
